<compile_context>
chip_gen: v7x
topology: tpu7x:2x2x1
jax: 0.10.0
libtpu: 0.0.40
codegen_flags: <defaults>
</compile_context>

<pallas_src>
import jax
import jax.numpy as jnp
from jax.experimental import pallas as pl
from jax.experimental.pallas import tpu as pltpu


# ---------------------------------------------------------------------------
# Pass 1: per-(sample, channel) partial sum and sum-of-squares.
# ---------------------------------------------------------------------------
def _bn_stats_kernel(x_ref, sum_ref, sumsq_ref):
    # x_ref: (C, TL) f32 tile of one batch sample (N axis squeezed out).
    # sum_ref / sumsq_ref: (C, 1) accumulators for that sample; their block
    # index only depends on the N (parallel) grid axis, so they stay resident
    # while we sweep the HW-tile ("arbitrary") axis.
    @pl.when(pl.program_id(1) == 0)
    def _():
        sum_ref[...] = jnp.zeros_like(sum_ref)
        sumsq_ref[...] = jnp.zeros_like(sumsq_ref)

    x = x_ref[...]
    # Lane reduction of a wide tile: lowers to VPU adds across vregs plus one
    # intra-vreg XLU reduce -- cheap next to the tile's HBM DMA.
    sum_ref[...] += jnp.sum(x, axis=-1, keepdims=True)
    sumsq_ref[...] += jnp.sum(x * x, axis=-1, keepdims=True)


# ---------------------------------------------------------------------------
# Pass 2: fused normalize + affine, y = x * scale + shift (per channel).
# ---------------------------------------------------------------------------
def _bn_apply_kernel(x_ref, scale_ref, shift_ref, y_ref):
    # x_ref/y_ref: (C, TL);  scale_ref/shift_ref: (C, 1) -- broadcast over lanes.
    y_ref[...] = x_ref[...] * scale_ref[...] + shift_ref[...]


def _choose_hw_tile(hw, c, max_block_bytes=2 * 1024 * 1024):
    """Largest multiple-of-128 divisor of `hw` whose (c, tile) f32 block fits."""
    if hw % 128 != 0:
        return hw  # full-extent block is always legal
    max_lanes = max(128, (max_block_bytes // (4 * c)) // 128 * 128)
    best = 128
    d = 128
    while d <= min(hw, max_lanes):
        if hw % d == 0:
            best = d
        d += 128
    return best


def batchnorm2d_train(x_nchw, weight, bias, running_mean, running_var,
                      eps=1e-5, momentum=0.9):
    """Training-mode forward of the custom BatchNorm2d module.

    x_nchw: (N, C, H, W) float32
    weight, bias, running_mean, running_var: (C,) float32
    Returns (y_nchw, new_running_mean, new_running_var).
    """
    N, C, H, W = x_nchw.shape
    HW = H * W
    x_ncl = x_nchw.reshape(N, C, HW).astype(jnp.float32)  # free reshape, no transpose

    TL = _choose_hw_tile(HW, C)
    grid = (N, HW // TL)
    vmem_bytes = 32 * 1024 * 1024  # explicit; safe on v5e/v6e (128 MiB) and v7x (64 MiB)

    # ---- Pass 1: per-sample sum / sum-of-squares ---------------------------
    sum_nc1, sumsq_nc1 = pl.pallas_call(
        _bn_stats_kernel,
        out_shape=(jax.ShapeDtypeStruct((N, C, 1), jnp.float32),
                   jax.ShapeDtypeStruct((N, C, 1), jnp.float32)),
        grid_spec=pltpu.PrefetchScalarGridSpec(
            num_scalar_prefetch=0,
            grid=grid,
            in_specs=[pl.BlockSpec((None, C, TL), lambda n, l: (n, 0, l))],
            out_specs=[pl.BlockSpec((None, C, 1), lambda n, l: (n, 0, 0)),
                       pl.BlockSpec((None, C, 1), lambda n, l: (n, 0, 0))],
        ),
        compiler_params=pltpu.CompilerParams(
            dimension_semantics=("parallel", "arbitrary"),
            vmem_limit_bytes=vmem_bytes),
    )(x_ncl)

    # ---- Tiny C-length finalize (glue) -------------------------------------
    count = float(N * HW)
    s = jnp.sum(sum_nc1[:, :, 0], axis=0)      # (C,)
    ss = jnp.sum(sumsq_nc1[:, :, 0], axis=0)   # (C,)
    mean = s / count
    var_biased = jnp.maximum(ss / count - mean * mean, 0.0)
    # Module uses torch.Tensor.var() default => UNBIASED variance everywhere.
    var = var_biased * (count / (count - 1.0))

    inv_std = 1.0 / jnp.sqrt(var + eps)
    w = weight.astype(jnp.float32)
    b = bias.astype(jnp.float32)
    scale = (w * inv_std).reshape(C, 1)
    shift = (b - mean * w * inv_std).reshape(C, 1)

    # ---- Pass 2: apply ------------------------------------------------------
    y_ncl = pl.pallas_call(
        _bn_apply_kernel,
        out_shape=jax.ShapeDtypeStruct((N, C, HW), jnp.float32),
        grid_spec=pltpu.PrefetchScalarGridSpec(
            num_scalar_prefetch=0,
            grid=grid,
            in_specs=[pl.BlockSpec((None, C, TL), lambda n, l: (n, 0, l)),
                      pl.BlockSpec((C, 1), lambda n, l: (0, 0)),
                      pl.BlockSpec((C, 1), lambda n, l: (0, 0))],
            out_specs=pl.BlockSpec((None, C, TL), lambda n, l: (n, 0, l)),
        ),
        compiler_params=pltpu.CompilerParams(
            dimension_semantics=("parallel", "parallel"),
            vmem_limit_bytes=vmem_bytes),
    )(x_ncl, scale, shift)

    y_nchw = y_ncl.reshape(N, C, H, W)  # free reshape back to NCHW

    # Running-stat update exactly as the module writes it (momentum = 0.9):
    #   running = momentum*running + (1 - momentum)*batch_stat
    new_running_mean = momentum * running_mean + (1.0 - momentum) * mean
    new_running_var = momentum * running_var + (1.0 - momentum) * var
    return y_nchw, new_running_mean, new_running_var


# ---------------------------------------------------------------------------
# Pure-JAX reference (matches the PyTorch module's training branch).
# ---------------------------------------------------------------------------
def _reference(x, weight, bias, running_mean, running_var, eps, momentum):
    mean = jnp.mean(x, axis=(0, 2, 3))
    var = jnp.var(x, axis=(0, 2, 3), ddof=1)   # unbiased, like torch.Tensor.var()
    xn = (x - mean.reshape(1, -1, 1, 1)) / jnp.sqrt(var.reshape(1, -1, 1, 1) + eps)
    y = xn * weight.reshape(1, -1, 1, 1) + bias.reshape(1, -1, 1, 1)
    rm = momentum * running_mean + (1.0 - momentum) * mean
    rv = momentum * running_var + (1.0 - momentum) * var
    return y, rm, rv


if __name__ == "__main__":
    # Small shapes consistent with the Model: bn1 sees (N, 64, H, W) activations.
    N, C, H, W = 2, 64, 16, 16
    eps, momentum = 1e-5, 0.9

    key = jax.random.PRNGKey(0)
    kx, kw, kb = jax.random.split(key, 3)
    x = jax.random.normal(kx, (N, C, H, W), dtype=jnp.float32)
    # Module init is weight=1, bias=0; perturb slightly so the affine path is tested.
    weight = 1.0 + 0.1 * jax.random.normal(kw, (C,), dtype=jnp.float32)
    bias = 0.1 * jax.random.normal(kb, (C,), dtype=jnp.float32)
    running_mean = jnp.zeros((C,), dtype=jnp.float32)
    running_var = jnp.ones((C,), dtype=jnp.float32)

    y, new_rm, new_rv = batchnorm2d_train(x, weight, bias, running_mean, running_var,
                                          eps=eps, momentum=momentum)
    jax.block_until_ready((y, new_rm, new_rv))

    y_ref, rm_ref, rv_ref = _reference(x, weight, bias, running_mean, running_var,
                                       eps, momentum)
    assert jnp.allclose(y, y_ref, atol=1e-4, rtol=1e-4), "y mismatch vs reference"
    assert jnp.allclose(new_rm, rm_ref, atol=1e-4, rtol=1e-4), "running_mean mismatch"
    assert jnp.allclose(new_rv, rv_ref, atol=1e-4, rtol=1e-4), "running_var mismatch"

    print("KERNEL_OK")
</pallas_src>

<mosaic_0001>
module attributes {stable_mosaic.version = 11 : i64} {
  func.func @_bn_stats_kernel(%arg0: i32, %arg1: i32, %arg2: memref<1x64x256xf32, #tpu.memory_space<vmem>>, %arg3: memref<1x64x1xf32, #tpu.memory_space<vmem>>, %arg4: memref<1x64x1xf32, #tpu.memory_space<vmem>>) attributes {dimension_semantics = [#tpu.dimension_semantics<parallel>, #tpu.dimension_semantics<arbitrary>], iteration_bounds = array<i64: 2, 1>, scalar_prefetch = 0 : i64, scratch_operands = 0 : i64, tpu.core_type = #tpu.core_type<tc>, window_params = [{transform_indices = @transform_0, window_bounds = array<i64: 1, 64, 256>}, {transform_indices = @transform_1, window_bounds = array<i64: 1, 64, 1>}, {transform_indices = @transform_2, window_bounds = array<i64: 1, 64, 1>}]} {
    %c0_i32 = arith.constant 0 : i32
    %0 = arith.cmpi eq, %arg1, %c0_i32 : i32
    %1 = arith.extui %0 : i1 to i32
    %c0_i32_0 = arith.constant 0 : i32
    %2 = arith.cmpi ne, %1, %c0_i32_0 : i32
    scf.if %2 {
      %cst_16 = arith.constant 0.000000e+00 : f32
      %22 = vector.broadcast %cst_16 : f32 to vector<64x1xf32>
      %c0_17 = arith.constant 0 : index
      %c0_18 = arith.constant 0 : index
      %c0_19 = arith.constant 0 : index
      %23 = vector.load %arg3[%c0_17, %c0_18, %c0_19] : memref<1x64x1xf32, #tpu.memory_space<vmem>>, vector<1x64x1xf32>
      %24 = vector.shape_cast %23 : vector<1x64x1xf32> to vector<64x1xf32>
      %25 = vector.shape_cast %22 : vector<64x1xf32> to vector<1x64x1xf32>
      tpu.vector_store %arg3[%c0_17, %c0_18, %c0_19], %25 {strides = array<i32>} : memref<1x64x1xf32, #tpu.memory_space<vmem>>, vector<1x64x1xf32>,
      %cst_20 = arith.constant 0.000000e+00 : f32
      %26 = vector.broadcast %cst_20 : f32 to vector<64x1xf32>
      %c0_21 = arith.constant 0 : index
      %c0_22 = arith.constant 0 : index
      %c0_23 = arith.constant 0 : index
      %27 = vector.load %arg4[%c0_21, %c0_22, %c0_23] : memref<1x64x1xf32, #tpu.memory_space<vmem>>, vector<1x64x1xf32>
      %28 = vector.shape_cast %27 : vector<1x64x1xf32> to vector<64x1xf32>
      %29 = vector.shape_cast %26 : vector<64x1xf32> to vector<1x64x1xf32>
      tpu.vector_store %arg4[%c0_21, %c0_22, %c0_23], %29 {strides = array<i32>} : memref<1x64x1xf32, #tpu.memory_space<vmem>>, vector<1x64x1xf32>,
    } else {
    }
    %c0 = arith.constant 0 : index
    %c0_1 = arith.constant 0 : index
    %c0_2 = arith.constant 0 : index
    %3 = vector.load %arg2[%c0, %c0_1, %c0_2] : memref<1x64x256xf32, #tpu.memory_space<vmem>>, vector<1x64x256xf32>
    %4 = vector.shape_cast %3 : vector<1x64x256xf32> to vector<64x256xf32>
    %c0_3 = arith.constant 0 : index
    %c0_4 = arith.constant 0 : index
    %c0_5 = arith.constant 0 : index
    %5 = vector.load %arg3[%c0_3, %c0_4, %c0_5] : memref<1x64x1xf32, #tpu.memory_space<vmem>>, vector<1x64x1xf32>
    %6 = vector.shape_cast %5 : vector<1x64x1xf32> to vector<64x1xf32>
    %cst = arith.constant dense<0.000000e+00> : vector<64xf32>
    %7 = vector.multi_reduction <add>, %4, %cst [1] : vector<64x256xf32> to vector<64xf32>
    %8 = vector.shape_cast %7 : vector<64xf32> to vector<64x1xf32>
    %9 = arith.addf %6, %8 : vector<64x1xf32>
    %c0_6 = arith.constant 0 : index
    %c0_7 = arith.constant 0 : index
    %c0_8 = arith.constant 0 : index
    %10 = vector.load %arg3[%c0_6, %c0_7, %c0_8] : memref<1x64x1xf32, #tpu.memory_space<vmem>>, vector<1x64x1xf32>
    %11 = vector.shape_cast %10 : vector<1x64x1xf32> to vector<64x1xf32>
    %12 = vector.shape_cast %9 : vector<64x1xf32> to vector<1x64x1xf32>
    tpu.vector_store %arg3[%c0_6, %c0_7, %c0_8], %12 {strides = array<i32>} : memref<1x64x1xf32, #tpu.memory_space<vmem>>, vector<1x64x1xf32>,
    %c0_9 = arith.constant 0 : index
    %c0_10 = arith.constant 0 : index
    %c0_11 = arith.constant 0 : index
    %13 = vector.load %arg4[%c0_9, %c0_10, %c0_11] : memref<1x64x1xf32, #tpu.memory_space<vmem>>, vector<1x64x1xf32>
    %14 = vector.shape_cast %13 : vector<1x64x1xf32> to vector<64x1xf32>
    %15 = arith.mulf %4, %4 : vector<64x256xf32>
    %cst_12 = arith.constant dense<0.000000e+00> : vector<64xf32>
    %16 = vector.multi_reduction <add>, %15, %cst_12 [1] : vector<64x256xf32> to vector<64xf32>
    %17 = vector.shape_cast %16 : vector<64xf32> to vector<64x1xf32>
    %18 = arith.addf %14, %17 : vector<64x1xf32>
    %c0_13 = arith.constant 0 : index
    %c0_14 = arith.constant 0 : index
    %c0_15 = arith.constant 0 : index
    %19 = vector.load %arg4[%c0_13, %c0_14, %c0_15] : memref<1x64x1xf32, #tpu.memory_space<vmem>>, vector<1x64x1xf32>
    %20 = vector.shape_cast %19 : vector<1x64x1xf32> to vector<64x1xf32>
    %21 = vector.shape_cast %18 : vector<64x1xf32> to vector<1x64x1xf32>
    tpu.vector_store %arg4[%c0_13, %c0_14, %c0_15], %21 {strides = array<i32>} : memref<1x64x1xf32, #tpu.memory_space<vmem>>, vector<1x64x1xf32>,
    return
  }
  func.func @transform_0(%arg0: i32, %arg1: i32) -> (i32, i32, i32) {
    %c0_i32 = arith.constant 0 : i32
    %c0_i32_0 = arith.constant 0 : i32
    return %arg0, %c0_i32, %arg1 : i32, i32, i32
  }
  func.func @transform_1(%arg0: i32, %arg1: i32) -> (i32, i32, i32) {
    %c0_i32 = arith.constant 0 : i32
    %c0_i32_0 = arith.constant 0 : i32
    %c0_i32_1 = arith.constant 0 : i32
    return %arg0, %c0_i32, %c0_i32_0 : i32, i32, i32
  }
  func.func @transform_2(%arg0: i32, %arg1: i32) -> (i32, i32, i32) {
    %c0_i32 = arith.constant 0 : i32
    %c0_i32_0 = arith.constant 0 : i32
    %c0_i32_1 = arith.constant 0 : i32
    return %arg0, %c0_i32, %c0_i32_0 : i32, i32, i32
  }
}

</mosaic_0001>

<llo_original>
// kernel: tpu_custom_call.1
$region0: #{tpu_custom_call.1}
  #allocation0 [shape = 'u32[]', space=smem, size = 0x4, offset = 0x4, fixed_abs, tag = 'smem constant byte address 0x4 - core index']
  #allocation1 [shape = 'u32[144,128]{1,0:T(1,128)}', space=vmem, size = 0x12000, scoped, tag = 'internal scratch']
  %s0 = inlined_call_operand.hbm [shape: f32[2,64,256], index: 0, kind: input, shape index: {}]
  %s1 = inlined_call_operand.vmem [shape: f32[2,64,1], index: 1, kind: output, shape index: {0}]
  %s2 = inlined_call_operand.vmem [shape: f32[2,64,1], index: 2, kind: output, shape index: {1}]
  %3 = xla_tuple %s1, %s2
  %s4 = sld [smem:[#allocation0]]
  $region53: #{tpu_custom_call.1} parent=0
    _
  %s6 = ssub.s32 1, %s4
  %s7 = scalar_select 0, %s6, %s4
  $region1: #{tpu_custom_call.1} parent=0
    #allocation2 [shape = 'u8[131072]{0}', space=vmem, size = 0x20000, scoped, tag = 'input window, operand 0']
    #allocation3 [shape = 's32[2]{0}', space=sflag, size = 0x8, scoped, tag = 'scoped memory for tpu_custom_call.1']
    %8 = vsyncpa [#allocation3], 0
    %s9 = scalar_lea.sflag [#allocation3], 1
    %10 = vsyncpa %s9, 0
    loop: start=0, step=1, limit=4
    $region2: #{tpu_custom_call.1} parent=1 // loop_pre_header
      _
    $region3: #{tpu_custom_call.1} parent=1 // loop_header
      %s12 = sphi 0, %s16
      %p13 = scmp.ge.s32.totalorder %s12, 4
      %s19 = sphi 0, %s31
      %s20 = sphi 0, %s27
      %s21 = sphi 0, %s19
      %s22 = sphi 0, %s20
      %s23 = sphi 0, %s21
      %s24 = sphi 0, %s22
      %s36 = sphi 0, %s38
      %s39 = sphi 0, %s36
      %s40 = sphi 0, %s39
      %s56 = sphi 0, %s40
      %s62 = sphi 0, %s64
      %s65 = sphi 0, %s62
      %s66 = sphi 0, %s65
      %s82 = sphi 0, %s66
      %s88 = sphi 0, %s90
      %s91 = sphi 0, %s88
      %s92 = sphi 0, %s91
      %s108 = sphi 0, %s92
    $region4: #{tpu_custom_call.1} parent=1 // loop_header_branch
      %15 = sbr.rel (%p13) target = $region8
    $region5: #{tpu_custom_call.1} parent=1 // loop_body
      %s17 = ssub.s32 %s12, 1
      %s18 = ssub.s32 %s12, 2
      %s25 = sadd.s32 1, %s20
      %p26 = scmp.ge.s32.totalorder %s25, 1
      %s27 = scalar_select %p26, 0, %s25
      %s28 = sadd.s32 1, %s19
      %s29 = scalar_select %p26, %s28, %s19
      %p30 = scmp.ge.s32.totalorder %s29, 2
      %s31 = scalar_select %p30, 0, %s29
      %s32 = ssub.s32 %s19, %s31
      %s33 = ssub.s32 %s20, %s27
      %s34 = sor.u32 %s32, %s33
      %p35 = scmp.eq.s32.totalorder %s34, 0
      %s37 = sadd.s32 %s36, 1
      %s38 = scalar_select %p35, %s36, %s37
      %p41 = pneg %p35
      %p42 = scmp.eq.s32.totalorder %s12, 1
      %p43 = por %p41, %p42
      %p44 = scmp.ne.s32.totalorder %s36, %s39
      %p45 = scmp.eq.s32.totalorder %s12, 0
      %p46 = por %p44, %p45
      %p47 = scmp.ne.s32.totalorder %s36, %s39
      %p48 = scmp.eq.s32.totalorder %s17, 1
      %p49 = por %p47, %p48
      %p50 = scmp.ne.s32.totalorder %s39, %s40
      %p51 = scmp.eq.s32.totalorder %s17, 0
      %p52 = por %p50, %p51
      %p53 = scmp.ne.s32.totalorder %s39, %s40
      %p54 = scmp.eq.s32.totalorder %s18, 1
      %p55 = por %p53, %p54
      %p57 = scmp.ne.s32.totalorder %s40, %s56
      %p58 = scmp.eq.s32.totalorder %s18, 0
      %p59 = por %p57, %p58
      %s60 = ssub.s32 %s19, %s31
      %p61 = scmp.eq.s32.totalorder %s60, 0
      %s63 = sadd.s32 %s62, 1
      %s64 = scalar_select %p61, %s62, %s63
      %p67 = pneg %p61
      %p68 = scmp.eq.s32.totalorder %s12, 1
      %p69 = por %p67, %p68
      %p70 = scmp.ne.s32.totalorder %s62, %s65
      %p71 = scmp.eq.s32.totalorder %s12, 0
      %p72 = por %p70, %p71
      %p73 = scmp.ne.s32.totalorder %s62, %s65
      %p74 = scmp.eq.s32.totalorder %s17, 1
      %p75 = por %p73, %p74
      %p76 = scmp.ne.s32.totalorder %s65, %s66
      %p77 = scmp.eq.s32.totalorder %s17, 0
      %p78 = por %p76, %p77
      %p79 = scmp.ne.s32.totalorder %s65, %s66
      %p80 = scmp.eq.s32.totalorder %s18, 1
      %p81 = por %p79, %p80
      %p83 = scmp.ne.s32.totalorder %s66, %s82
      %p84 = scmp.eq.s32.totalorder %s18, 0
      %p85 = por %p83, %p84
      %s86 = ssub.s32 %s19, %s31
      %p87 = scmp.eq.s32.totalorder %s86, 0
      %s89 = sadd.s32 %s88, 1
      %s90 = scalar_select %p87, %s88, %s89
      %p93 = pneg %p87
      %p94 = scmp.eq.s32.totalorder %s12, 1
      %p95 = por %p93, %p94
      %p96 = scmp.ne.s32.totalorder %s88, %s91
      %p97 = scmp.eq.s32.totalorder %s12, 0
      %p98 = por %p96, %p97
      %p99 = scmp.ne.s32.totalorder %s88, %s91
      %p100 = scmp.eq.s32.totalorder %s17, 1
      %p101 = por %p99, %p100
      %p102 = scmp.ne.s32.totalorder %s91, %s92
      %p103 = scmp.eq.s32.totalorder %s17, 0
      %p104 = por %p102, %p103
      %p105 = scmp.ne.s32.totalorder %s91, %s92
      %p106 = scmp.eq.s32.totalorder %s18, 1
      %p107 = por %p105, %p106
      %p109 = scmp.ne.s32.totalorder %s92, %s108
      %p110 = scmp.eq.s32.totalorder %s18, 0
      %p111 = por %p109, %p110
      %p112 = scmp.le.s32.totalorder 1, %s12
      %p113 = scmp.lt.s32.totalorder %s12, 3
      %p114 = pnand %p112, %p113
      %p115 = pneg %p114
      // Predicated region
      $region9: #{tpu_custom_call.1} parent=5 // pred_check
        _
      $region10: #{tpu_custom_call.1} parent=5 // pred_check_branch
        %117 = sbr.rel (%p114) target = $region12
      $region11: #{tpu_custom_call.1} parent=5 // pred_region
        %s118 = ssub.s32 %s12, 1
      $region12: #{tpu_custom_call.1} parent=5 // pred_fallthru
        _
      %p119 = scmp.lt.s32.totalorder %s12, 2
      // Predicated region
      $region13: #{tpu_custom_call.1} parent=5 // pred_check
        %p120 = pneg %p119
      $region14: #{tpu_custom_call.1} parent=5 // pred_check_branch
        %122 = sbr.rel (%p120) target = $region16
      $region15: #{tpu_custom_call.1} parent=5 // pred_region
        // Predicated region
        $region17: #{tpu_custom_call.1} parent=15 // pred_check
          %p123 = pneg %p46
        $region18: #{tpu_custom_call.1} parent=15 // pred_check_branch
          %125 = sbr.rel (%p123) target = $region20
        $region19: #{tpu_custom_call.1} parent=15 // pred_region
          %s126 = sand.u32 %s36, 1
          %s127 = scalar_lea.sflag [#allocation3], %s126
          %s128 = sand.u32 %s36, 1
          %s129 = smul.addr %s128, 128
          %s130 = scalar_lea.vmem [#allocation2], %s129
          %s131 = smul.u32 2, %s20
          %s133 = ssub.s32 2048, 2048
          %134 = vsyncadd %s127, %s133
          %s135 = smul.addr %s19, 16
          %s136 = sadd.s32 %s131, %s135
          %s137 = smul.addr %s136, 128
          %s138 = scalar_lea.hbm %s0, %s137
          %s139 = sshll.u32 %s130, 4
          %s140 = int_to_ptr.vmem [resolvable:$true] %s139
          %145 = dma.hbm_to_vmem [thread:$0]  %s138, 2048, %s140, %s127, 256, 256, 16
        $region20: #{tpu_custom_call.1} parent=15 // pred_fallthru
          _
      $region16: #{tpu_custom_call.1} parent=5 // pred_fallthru
        _
      %p146 = scmp.le.s32.totalorder 1, %s12
      %p147 = scmp.lt.s32.totalorder %s12, 3
      %p148 = pnand %p146, %p147
      %p149 = pneg %p148
      // Predicated region
      $region21: #{tpu_custom_call.1} parent=5 // pred_check
        _
      $region22: #{tpu_custom_call.1} parent=5 // pred_check_branch
        %151 = sbr.rel (%p148) target = $region24
      $region23: #{tpu_custom_call.1} parent=5 // pred_region
        %s152 = ssub.s32 %s12, 1
        %s153 = sand.u32 %s39, 1
        %s154 = scalar_lea.sflag [#allocation3], %s153
        %s155 = sand.u32 %s39, 1
        %s156 = smul.addr %s155, 128
        %s157 = scalar_lea.vmem [#allocation2], %s156
        // Predicated region
        $region25: #{tpu_custom_call.1} parent=23 // pred_check
          %p158 = pneg %p52
        $region26: #{tpu_custom_call.1} parent=23 // pred_check_branch
          %160 = sbr.rel (%p158) target = $region28
        $region27: #{tpu_custom_call.1} parent=23 // pred_region
          %161 = dma.done %s154, 2048
        $region28: #{tpu_custom_call.1} parent=23 // pred_fallthru
          _
        %s162 = sand.u32 %s39, 1
        %s163 = scalar_lea.sflag [#allocation3], %s162
        %s164 = sand.u32 %s39, 1
        %s165 = smul.addr %s164, 128
        %s166 = scalar_lea.vmem [#allocation2], %s165
        %p167 = pneg %p52
        %p168 = pneg %p49
        %p169 = pneg %p78
        %p170 = pneg %p75
        %p171 = scmp.lt.s32.totalorder %s21, 1
        %s172 = scalar_select %p171, %s21, 1
        %s173 = smul.addr %s172, 8
        %s174 = smul.addr %s173, 8
        %s175 = scalar_lea.vmem %s1, %s174
        %p176 = pneg %p104
        %p177 = pneg %p101
        %p178 = scmp.lt.s32.totalorder %s21, 1
        %s179 = scalar_select %p178, %s21, 1
        %s180 = smul.addr %s179, 8
        %s181 = smul.addr %s180, 8
        %s182 = scalar_lea.vmem %s2, %s181
        %s183 = smul.u32 2, %s22
        %p184 = scmp.lt.s32.totalorder %s21, 1
        %s185 = scalar_select %p184, %s21, 1
        %s186 = smul.addr %s185, 8
        %s187 = smul.addr %s186, 8
        %s188 = scalar_lea.vmem %s1, %s187
        %p189 = scmp.lt.s32.totalorder %s21, 1
        %s190 = scalar_select %p189, %s21, 1
        %s191 = smul.addr %s190, 8
        %s192 = smul.addr %s191, 8
        %s193 = scalar_lea.vmem %s2, %s192
        %p194 = scmp.eq.s32.totalorder %s22, 0
        // Predicated region
        $region29: #{tpu_custom_call.1} parent=23 // pred_check
          %p195 = pneg %p194
        $region30: #{tpu_custom_call.1} parent=23 // pred_check_branch
          %197 = sbr.rel (%p195) target = $region32
        $region31: #{tpu_custom_call.1} parent=23 // pred_region
          %vm198 = vcmask 7168
          %199 = vst.msk [vmem:[%s188] sm:$0xff] %vm198, 0.0
          %200 = vst.msk [vmem:[%s188 + $0x8] sm:$0xff] %vm198, 0.0
          %201 = vst.msk [vmem:[%s188 + $0x10] sm:$0xff] %vm198, 0.0
          %202 = vst.msk [vmem:[%s188 + $0x18] sm:$0xff] %vm198, 0.0
          %203 = vst.msk [vmem:[%s188 + $0x20] sm:$0xff] %vm198, 0.0
          %204 = vst.msk [vmem:[%s188 + $0x28] sm:$0xff] %vm198, 0.0
          %205 = vst.msk [vmem:[%s188 + $0x30] sm:$0xff] %vm198, 0.0
          %206 = vst.msk [vmem:[%s188 + $0x38] sm:$0xff] %vm198, 0.0
          %207 = vst.msk [vmem:[%s193] sm:$0xff] %vm198, 0.0
          %208 = vst.msk [vmem:[%s193 + $0x8] sm:$0xff] %vm198, 0.0
          %209 = vst.msk [vmem:[%s193 + $0x10] sm:$0xff] %vm198, 0.0
          %210 = vst.msk [vmem:[%s193 + $0x18] sm:$0xff] %vm198, 0.0
          %211 = vst.msk [vmem:[%s193 + $0x20] sm:$0xff] %vm198, 0.0
          %212 = vst.msk [vmem:[%s193 + $0x28] sm:$0xff] %vm198, 0.0
          %213 = vst.msk [vmem:[%s193 + $0x30] sm:$0xff] %vm198, 0.0
          %214 = vst.msk [vmem:[%s193 + $0x38] sm:$0xff] %vm198, 0.0
        $region32: #{tpu_custom_call.1} parent=23 // pred_fallthru
          _
        %v215 = vld [vmem:[%s157] sm:$0xff]
        %v216 = vld [vmem:[%s157 + $0x8] sm:$0xff]
        %v217 = vld [vmem:[%s157 + $0x10] sm:$0xff]
        %v218 = vld [vmem:[%s157 + $0x18] sm:$0xff]
        %v219 = vld [vmem:[%s157 + $0x20] sm:$0xff]
        %v220 = vld [vmem:[%s157 + $0x28] sm:$0xff]
        %v221 = vld [vmem:[%s157 + $0x30] sm:$0xff]
        %v222 = vld [vmem:[%s157 + $0x38] sm:$0xff]
        %v223 = vld [vmem:[%s157 + $0x40] sm:$0xff]
        %v224 = vld [vmem:[%s157 + $0x48] sm:$0xff]
        %v225 = vld [vmem:[%s157 + $0x50] sm:$0xff]
        %v226 = vld [vmem:[%s157 + $0x58] sm:$0xff]
        %v227 = vld [vmem:[%s157 + $0x60] sm:$0xff]
        %v228 = vld [vmem:[%s157 + $0x68] sm:$0xff]
        %v229 = vld [vmem:[%s157 + $0x70] sm:$0xff]
        %v230 = vld [vmem:[%s157 + $0x78] sm:$0xff]
        %v231 = vld [vmem:[%s188] sm:$0xff]
        %v232 = vld [vmem:[%s188 + $0x8] sm:$0xff]
        %v233 = vld [vmem:[%s188 + $0x10] sm:$0xff]
        %v234 = vld [vmem:[%s188 + $0x18] sm:$0xff]
        %v235 = vld [vmem:[%s188 + $0x20] sm:$0xff]
        %v236 = vld [vmem:[%s188 + $0x28] sm:$0xff]
        %v237 = vld [vmem:[%s188 + $0x30] sm:$0xff]
        %v238 = vld [vmem:[%s188 + $0x38] sm:$0xff]
        %v239 = vadd.f32 %v215, %v216
        %240 = vadd.xlane.f32.xlu0 %v239
        %v241 = vpop.xlane.xlu0 %240
        %v242 = vadd.f32 %v217, %v218
        %243 = vadd.xlane.f32.xlu0 %v242
        %v244 = vpop.xlane.xlu0 %243
        %v245 = vadd.f32 %v219, %v220
        %246 = vadd.xlane.f32.xlu0 %v245
        %v247 = vpop.xlane.xlu0 %246
        %v248 = vadd.f32 %v221, %v222
        %249 = vadd.xlane.f32.xlu0 %v248
        %v250 = vpop.xlane.xlu0 %249
        %v251 = vadd.f32 %v223, %v224
        %252 = vadd.xlane.f32.xlu0 %v251
        %v253 = vpop.xlane.xlu0 %252
        %v254 = vadd.f32 %v225, %v226
        %255 = vadd.xlane.f32.xlu0 %v254
        %v256 = vpop.xlane.xlu0 %255
        %v257 = vadd.f32 %v227, %v228
        %258 = vadd.xlane.f32.xlu0 %v257
        %v259 = vpop.xlane.xlu0 %258
        %v260 = vadd.f32 %v229, %v230
        %261 = vadd.xlane.f32.xlu0 %v260
        %v262 = vpop.xlane.xlu0 %261
        %v263 = vadd.f32 %v231, %v241
        %v264 = vadd.f32 %v232, %v244
        %v265 = vadd.f32 %v233, %v247
        %v266 = vadd.f32 %v234, %v250
        %v267 = vadd.f32 %v235, %v253
        %v268 = vadd.f32 %v236, %v256
        %v269 = vadd.f32 %v237, %v259
        %v270 = vadd.f32 %v238, %v262
        %vm271 = vcmask 7168
        %272 = vst.msk [vmem:[%s188] sm:$0xff] %vm271, %v263
        %273 = vst.msk [vmem:[%s188 + $0x8] sm:$0xff] %vm271, %v264
        %274 = vst.msk [vmem:[%s188 + $0x10] sm:$0xff] %vm271, %v265
        %275 = vst.msk [vmem:[%s188 + $0x18] sm:$0xff] %vm271, %v266
        %276 = vst.msk [vmem:[%s188 + $0x20] sm:$0xff] %vm271, %v267
        %277 = vst.msk [vmem:[%s188 + $0x28] sm:$0xff] %vm271, %v268
        %278 = vst.msk [vmem:[%s188 + $0x30] sm:$0xff] %vm271, %v269
        %279 = vst.msk [vmem:[%s188 + $0x38] sm:$0xff] %vm271, %v270
        %v280 = vld [vmem:[%s193] sm:$0xff]
        %v281 = vld [vmem:[%s193 + $0x8] sm:$0xff]
        %v282 = vld [vmem:[%s193 + $0x10] sm:$0xff]
        %v283 = vld [vmem:[%s193 + $0x18] sm:$0xff]
        %v284 = vld [vmem:[%s193 + $0x20] sm:$0xff]
        %v285 = vld [vmem:[%s193 + $0x28] sm:$0xff]
        %v286 = vld [vmem:[%s193 + $0x30] sm:$0xff]
        %v287 = vld [vmem:[%s193 + $0x38] sm:$0xff]
        %v288 = vmul.f32 %v215, %v215
        %v289 = vmul.f32 %v216, %v216
        %v290 = vmul.f32 %v217, %v217
        %v291 = vmul.f32 %v218, %v218
        %v292 = vmul.f32 %v219, %v219
        %v293 = vmul.f32 %v220, %v220
        %v294 = vmul.f32 %v221, %v221
        %v295 = vmul.f32 %v222, %v222
        %v296 = vmul.f32 %v223, %v223
        %v297 = vmul.f32 %v224, %v224
        %v298 = vmul.f32 %v225, %v225
        %v299 = vmul.f32 %v226, %v226
        %v300 = vmul.f32 %v227, %v227
        %v301 = vmul.f32 %v228, %v228
        %v302 = vmul.f32 %v229, %v229
        %v303 = vmul.f32 %v230, %v230
        %v304 = vadd.f32 %v288, %v289
        %305 = vadd.xlane.f32.xlu0 %v304
        %v306 = vpop.xlane.xlu0 %305
        %v307 = vadd.f32 %v290, %v291
        %308 = vadd.xlane.f32.xlu0 %v307
        %v309 = vpop.xlane.xlu0 %308
        %v310 = vadd.f32 %v292, %v293
        %311 = vadd.xlane.f32.xlu0 %v310
        %v312 = vpop.xlane.xlu0 %311
        %v313 = vadd.f32 %v294, %v295
        %314 = vadd.xlane.f32.xlu0 %v313
        %v315 = vpop.xlane.xlu0 %314
        %v316 = vadd.f32 %v296, %v297
        %317 = vadd.xlane.f32.xlu0 %v316
        %v318 = vpop.xlane.xlu0 %317
        %v319 = vadd.f32 %v298, %v299
        %320 = vadd.xlane.f32.xlu0 %v319
        %v321 = vpop.xlane.xlu0 %320
        %v322 = vadd.f32 %v300, %v301
        %323 = vadd.xlane.f32.xlu0 %v322
        %v324 = vpop.xlane.xlu0 %323
        %v325 = vadd.f32 %v302, %v303
        %326 = vadd.xlane.f32.xlu0 %v325
        %v327 = vpop.xlane.xlu0 %326
        %v328 = vadd.f32 %v280, %v306
        %v329 = vadd.f32 %v281, %v309
        %v330 = vadd.f32 %v282, %v312
        %v331 = vadd.f32 %v283, %v315
        %v332 = vadd.f32 %v284, %v318
        %v333 = vadd.f32 %v285, %v321
        %v334 = vadd.f32 %v286, %v324
        %v335 = vadd.f32 %v287, %v327
        %336 = vst.msk [vmem:[%s193] sm:$0xff] %vm271, %v328
        %337 = vst.msk [vmem:[%s193 + $0x8] sm:$0xff] %vm271, %v329
        %338 = vst.msk [vmem:[%s193 + $0x10] sm:$0xff] %vm271, %v330
        %339 = vst.msk [vmem:[%s193 + $0x18] sm:$0xff] %vm271, %v331
        %340 = vst.msk [vmem:[%s193 + $0x20] sm:$0xff] %vm271, %v332
        %341 = vst.msk [vmem:[%s193 + $0x28] sm:$0xff] %vm271, %v333
        %342 = vst.msk [vmem:[%s193 + $0x30] sm:$0xff] %vm271, %v334
        %343 = vst.msk [vmem:[%s193 + $0x38] sm:$0xff] %vm271, %v335
        %p344 = scmp.lt.s32.totalorder %s21, 1
        %s345 = scalar_select %p344, %s21, 1
        %s346 = smul.addr %s345, 8
        %s347 = smul.addr %s346, 8
        %s348 = scalar_lea.vmem %s1, %s347
        %p349 = scmp.lt.s32.totalorder %s21, 1
        %s350 = scalar_select %p349, %s21, 1
        %s351 = smul.addr %s350, 8
        %s352 = smul.addr %s351, 8
        %s353 = scalar_lea.vmem %s2, %s352
        // Predicated region
        $region33: #{tpu_custom_call.1} parent=23 // pred_check
          %p354 = pneg %p75
        $region34: #{tpu_custom_call.1} parent=23 // pred_check_branch
          %356 = sbr.rel (%p354) target = $region36
        $region35: #{tpu_custom_call.1} parent=23 // pred_region
          _
        $region36: #{tpu_custom_call.1} parent=23 // pred_fallthru
          _
        // Predicated region
        $region37: #{tpu_custom_call.1} parent=23 // pred_check
          %p357 = pneg %p101
        $region38: #{tpu_custom_call.1} parent=23 // pred_check_branch
          %359 = sbr.rel (%p357) target = $region40
        $region39: #{tpu_custom_call.1} parent=23 // pred_region
          _
        $region40: #{tpu_custom_call.1} parent=23 // pred_fallthru
          _
      $region24: #{tpu_custom_call.1} parent=5 // pred_fallthru
        _
      %p360 = scmp.le.s32.totalorder 2, %s12
      // Predicated region
      $region41: #{tpu_custom_call.1} parent=5 // pred_check
        %p361 = pneg %p360
      $region42: #{tpu_custom_call.1} parent=5 // pred_check_branch
        %363 = sbr.rel (%p361) target = $region44
      $region43: #{tpu_custom_call.1} parent=5 // pred_region
        %s364 = ssub.s32 %s12, 2
        // Predicated region
        $region45: #{tpu_custom_call.1} parent=43 // pred_check
          %p365 = pneg %p81
        $region46: #{tpu_custom_call.1} parent=43 // pred_check_branch
          %367 = sbr.rel (%p365) target = $region48
        $region47: #{tpu_custom_call.1} parent=43 // pred_region
          %p368 = scmp.lt.s32.totalorder %s23, 1
          %s369 = scalar_select %p368, %s23, 1
          %s370 = smul.addr %s369, 8
          %s371 = smul.addr %s370, 8
          %s372 = scalar_lea.vmem %s1, %s371
        $region48: #{tpu_custom_call.1} parent=43 // pred_fallthru
          _
        // Predicated region
        $region49: #{tpu_custom_call.1} parent=43 // pred_check
          %p373 = pneg %p107
        $region50: #{tpu_custom_call.1} parent=43 // pred_check_branch
          %375 = sbr.rel (%p373) target = $region52
        $region51: #{tpu_custom_call.1} parent=43 // pred_region
          %p376 = scmp.lt.s32.totalorder %s23, 1
          %s377 = scalar_select %p376, %s23, 1
          %s378 = smul.addr %s377, 8
          %s379 = smul.addr %s378, 8
          %s380 = scalar_lea.vmem %s2, %s379
        $region52: #{tpu_custom_call.1} parent=43 // pred_fallthru
          _
      $region44: #{tpu_custom_call.1} parent=5 // pred_fallthru
        _
    $region6: #{tpu_custom_call.1} parent=1 // loop_footer
      %s16 = sadd.s32 1, %s12
    $region7: #{tpu_custom_call.1} parent=1 // loop_footer_branch
      %11 = sbr.rel target = $region3
    $region8: #{tpu_custom_call.1} parent=1 // loop_exit
      _
    %381 = vsyncpa [#allocation3], 1
    %s382 = scalar_lea.sflag [#allocation3], 1
    %383 = vsyncpa %s382, 1

</llo_original>
